<compile_context>
chip_gen: v6e
topology: v6e:2x2x1
jax: 0.10.0
libtpu: 0.0.40
codegen_flags: <defaults>
</compile_context>

<pallas_src>
import functools

import numpy as np
import jax
import jax.numpy as jnp
from jax.experimental import pallas as pl
from jax.experimental.pallas import tpu as pltpu


_CHUNK = 512  # in-kernel cumsum chunk (multiple of 128, MXU-friendly)


def _round_up(x, m):
    return ((x + m - 1) // m) * m


def _choose_tile_hw(C, HW, chunk=_CHUNK, target_bytes=2 << 20,
                    max_tile=32768, vmem_budget=24 << 20):
    """Pixel tile over H*W: ~10*C bytes of HBM traffic per pixel column in
    kernel 1; target ~2 MiB/step, cap the double-buffered footprint for v7x."""
    t = target_bytes // max(1, 10 * C)
    cap = vmem_budget // max(1, 2 * (10 * C + 4))
    t = min(t, cap, max_tile)
    t = max(chunk, (t // chunk) * chunk)
    t = min(t, _round_up(HW, chunk))            # don't pad tiny inputs to huge tiles
    return t


def _fg_err_kernel(p_ref, l_ref, nerr_ref, fg_ref, gts_ref):
    """Per (batch, pixel-tile): fg[c,p] = (labels[p]==c), nerr = -|fg - probas|,
    plus per-tile per-class fg counts (partial gts)."""
    C, T = nerr_ref.shape
    probas = p_ref[...]                                    # (C, T)
    labels = l_ref[...]                                    # (1, T)
    cls = jax.lax.broadcasted_iota(jnp.int32, (C, T), 0)
    fg = (labels == cls).astype(jnp.float32)               # (1,T) vs (C,T) broadcast
    fg_ref[...] = fg.astype(jnp.bfloat16)                  # exact: values are 0/1
    nerr_ref[...] = -jnp.abs(fg - probas)                  # negated error
    gts_ref[...] = jnp.sum(fg, axis=-1, keepdims=True)     # (C, 1)


def _scan_kernel(nerr_ref, fg_ref, gts_ref, tri_ref, out_ref,
                 cumfg_c, loss_c, *, n_chunks, chunk):
    """Streaming per-class Lovasz gradient over pixel tiles (inputs already
    sorted by descending error per class, i.e. ascending nerr)."""
    t = pl.program_id(0)
    C, T = nerr_ref.shape

    @pl.when(t == 0)
    def _init():
        cumfg_c[...] = jnp.zeros(cumfg_c.shape, cumfg_c.dtype)
        loss_c[...] = jnp.zeros(loss_c.shape, loss_c.dtype)

    gts = gts_ref[...]                                     # (C, 1) total fg per class
    tri = tri_ref[...]                                     # (chunk, chunk) upper-tri 0/1
    base = t * T

    def body(j, carry):
        cumfg, loss = carry                                # (C,1), (C,1)
        off = pl.multiple_of(j * chunk, chunk)
        fg_b = fg_ref[:, pl.ds(off, chunk)]                # (C, chunk) bf16, 0/1
        nerr = nerr_ref[:, pl.ds(off, chunk)]              # (C, chunk) f32 (= -err)
        fg = fg_b.astype(jnp.float32)
        # chunk-local inclusive cumsum of fg on the MXU (exact: f32 accumulation)
        local = jnp.dot(fg_b, tri, preferred_element_type=jnp.float32)
        cum = local + cumfg                                # global cumsum(fg)
        pos = (jax.lax.broadcasted_iota(jnp.int32, (C, chunk), 1)
               + (base + off + 1)).astype(jnp.float32)     # 1-based global position
        inter = gts - cum
        union = gts + (pos - cum)                          # >= 1 everywhere
        # closed-form Lovasz gradient: no shift-by-one, no jaccard carry.
        grad = jnp.where(fg > 0.5,
                         1.0 / union,
                         inter / (union * (union - 1.0)))
        loss = loss - jnp.sum(nerr * grad, axis=-1, keepdims=True)   # err = -nerr
        cumfg = cumfg + local[:, chunk - 1:chunk]
        return cumfg, loss

    cumfg, loss = jax.lax.fori_loop(0, n_chunks, body,
                                    (cumfg_c[...], loss_c[...]))
    cumfg_c[...] = cumfg
    loss_c[...] = loss
    out_ref[...] = loss            # resident block; final write holds the total


def lovasz_loss(probas, labels, classes="present", per_image=False, ignore=None,
                tile_hw=None):
    assert classes == "present" and not per_image and ignore is None, \
        "only the PyTorch forward() defaults are implemented"
    probas = probas.astype(jnp.float32)
    B, C, H, W = probas.shape
    HW = H * W
    CH = _CHUNK

    THW = tile_hw if tile_hw is not None else _choose_tile_hw(C, HW)
    THW = max(CH, (int(THW) // CH) * CH)
    HWp = _round_up(HW, THW)
    n_t = HWp // THW
    Ptot = B * n_t * THW

    # No transpose; only a (usually empty) tail pad along H*W.
    probas3 = probas.reshape(B, C, HW)
    labels3 = labels.astype(jnp.int32).reshape(B, 1, HW)
    if HWp != HW:
        probas3 = jnp.pad(probas3, ((0, 0), (0, 0), (0, HWp - HW)))
        labels3 = jnp.pad(labels3, ((0, 0), (0, 0), (0, HWp - HW)),
                          constant_values=-1)   # -1 never matches a class -> fg=0, err=0

    nerr, fg, gts_part = pl.pallas_call(
        _fg_err_kernel,
        grid=(B, n_t),
        in_specs=[pl.BlockSpec((None, C, THW), lambda b, t: (b, 0, t)),
                  pl.BlockSpec((None, 1, THW), lambda b, t: (b, 0, t))],
        out_specs=(pl.BlockSpec((C, THW), lambda b, t: (0, b * n_t + t)),
                   pl.BlockSpec((C, THW), lambda b, t: (0, b * n_t + t)),
                   pl.BlockSpec((None, None, C, 1), lambda b, t: (b, t, 0, 0))),
        out_shape=(jax.ShapeDtypeStruct((C, Ptot), jnp.float32),
                   jax.ShapeDtypeStruct((C, Ptot), jnp.bfloat16),
                   jax.ShapeDtypeStruct((B, n_t, C, 1), jnp.float32)),
        compiler_params=pltpu.CompilerParams(
            dimension_semantics=("parallel", "parallel"),
            vmem_limit_bytes=32 * 1024 * 1024),
    )(probas3, labels3)

    gts = jnp.sum(gts_part, axis=(0, 1))                   # (C, 1) fg count per class

    # TODO(synk): the per-class descending sort (torch.sort) has no Pallas
    # primitive; one payload-carrying lax.sort stays in plain-JAX glue.
    # (Tie order may differ from torch.sort, but equal-error permutations leave
    #  the loss unchanged.)
    nerr_s, fg_s = jax.lax.sort((nerr, fg), dimension=1, num_keys=1)

    # Resident triangular matrix for the MXU chunked cumsum (bf16 0/1, exact).
    tri = jnp.triu(jnp.ones((CH, CH), dtype=jnp.float32)).astype(jnp.bfloat16)

    n_tiles = Ptot // THW
    n_chunks = THW // CH
    loss_c = pl.pallas_call(
        functools.partial(_scan_kernel, n_chunks=n_chunks, chunk=CH),
        grid=(n_tiles,),
        in_specs=[pl.BlockSpec((C, THW), lambda t: (0, t)),
                  pl.BlockSpec((C, THW), lambda t: (0, t)),
                  pl.BlockSpec((C, 1), lambda t: (0, 0)),
                  pl.BlockSpec((CH, CH), lambda t: (0, 0))],
        out_specs=pl.BlockSpec((C, 1), lambda t: (0, 0)),
        out_shape=jax.ShapeDtypeStruct((C, 1), jnp.float32),
        scratch_shapes=[pltpu.VMEM((C, 1), jnp.float32),    # running cumsum(fg)
                        pltpu.VMEM((C, 1), jnp.float32)],   # per-class loss acc
        compiler_params=pltpu.CompilerParams(
            dimension_semantics=("arbitrary",),
            vmem_limit_bytes=32 * 1024 * 1024),
    )(nerr_s, fg_s, gts, tri)

    # classes='present' mean (nan rows of absent classes are masked out here).
    present = gts[:, 0] > 0.0
    count = jnp.sum(present.astype(jnp.float32))
    total = jnp.sum(jnp.where(present, loss_c[:, 0], 0.0))
    return jnp.where(count > 0, total / jnp.maximum(count, 1.0), 0.0)


def _lovasz_ref_numpy(probas, labels):
    """Pure-numpy transcription of the PyTorch forward (classes='present')."""
    B, C, H, W = probas.shape
    pf = np.transpose(probas, (0, 2, 3, 1)).reshape(-1, C).astype(np.float32)
    lf = labels.reshape(-1)
    losses = []
    for c in range(C):
        fg = (lf == c).astype(np.float32)
        if fg.sum() == 0:
            continue
        errors = np.abs(fg - pf[:, c])
        perm = np.argsort(-errors, kind="stable")
        errors_sorted = errors[perm]
        fg_sorted = fg[perm]
        gts = fg_sorted.sum()
        inter = gts - np.cumsum(fg_sorted)
        union = gts + np.cumsum(1.0 - fg_sorted)
        jacc = 1.0 - inter / union
        jacc[1:] = jacc[1:] - jacc[:-1]
        losses.append(float(np.dot(errors_sorted, jacc)))
    return float(np.mean(losses)) if losses else 0.0


if __name__ == "__main__":
    key = jax.random.PRNGKey(0)
    kp, kl = jax.random.split(key)

    # Primary shape from the module spec: probas [2, 4, 16, 16], labels [2, 16, 16].
    B, C, H, W = 2, 4, 16, 16
    logits = jax.random.normal(kp, (B, C, H, W), dtype=jnp.float32)
    probas = jax.nn.softmax(logits, axis=1)
    labels = jax.random.randint(kl, (B, H, W), 0, C, dtype=jnp.int32)
    ref = _lovasz_ref_numpy(np.asarray(probas), np.asarray(labels))
    loss = jax.block_until_ready(lovasz_loss(probas, labels))
    assert np.allclose(np.asarray(loss), ref, rtol=3e-4, atol=3e-5), (float(loss), ref)

    # Odd shape with H*W tail padding (C=3, 15x15 -> padded to one 512 tile).
    kp2, kl2 = jax.random.split(kl)
    B2, C2, H2, W2 = 2, 3, 15, 15
    logits2 = jax.random.normal(kp2, (B2, C2, H2, W2), dtype=jnp.float32)
    probas2 = jax.nn.softmax(logits2, axis=1)
    labels2 = jax.random.randint(kl2, (B2, H2, W2), 0, C2, dtype=jnp.int32)
    ref2 = _lovasz_ref_numpy(np.asarray(probas2), np.asarray(labels2))
    loss2 = jax.block_until_ready(lovasz_loss(probas2, labels2))
    assert np.allclose(np.asarray(loss2), ref2, rtol=3e-4, atol=3e-5), (float(loss2), ref2)

    # Multi-tile / multi-chunk path: 40x40 image, forced 1024-lane tile
    # (2 HW tiles per image, 2 MXU chunks per tile, cross-tile carries exercised).
    kp3, kl3 = jax.random.split(kl2)
    B3, C3, H3, W3 = 2, 3, 40, 40
    logits3 = jax.random.normal(kp3, (B3, C3, H3, W3), dtype=jnp.float32)
    probas3 = jax.nn.softmax(logits3, axis=1)
    labels3 = jax.random.randint(kl3, (B3, H3, W3), 0, C3, dtype=jnp.int32)
    ref3 = _lovasz_ref_numpy(np.asarray(probas3), np.asarray(labels3))
    loss3 = jax.block_until_ready(lovasz_loss(probas3, labels3, tile_hw=1024))
    assert np.allclose(np.asarray(loss3), ref3, rtol=3e-4, atol=3e-5), (float(loss3), ref3)

    print("KERNEL_OK")
</pallas_src>

<mosaic_0001>
module attributes {stable_mosaic.version = 11 : i64} {
  func.func @_fg_err_kernel(%arg0: i32, %arg1: i32, %arg2: memref<1x4x512xf32, #tpu.memory_space<vmem>>, %arg3: memref<1x1x512xi32, #tpu.memory_space<vmem>>, %arg4: memref<4x512xf32, #tpu.memory_space<vmem>>, %arg5: memref<4x512xbf16, #tpu.memory_space<vmem>>, %arg6: memref<1x1x4x1xf32, #tpu.memory_space<vmem>>) attributes {dimension_semantics = [#tpu.dimension_semantics<parallel>, #tpu.dimension_semantics<parallel>], iteration_bounds = array<i64: 2, 1>, scalar_prefetch = 0 : i64, scratch_operands = 0 : i64, tpu.core_type = #tpu.core_type<tc>, window_params = [{transform_indices = @transform_0, window_bounds = array<i64: 1, 4, 512>}, {transform_indices = @transform_1, window_bounds = array<i64: 1, 1, 512>}, {transform_indices = @transform_2, window_bounds = array<i64: 4, 512>}, {transform_indices = @transform_3, window_bounds = array<i64: 4, 512>}, {transform_indices = @transform_4, window_bounds = array<i64: 1, 1, 4, 1>}]} {
    %c0 = arith.constant 0 : index
    %c0_0 = arith.constant 0 : index
    %c0_1 = arith.constant 0 : index
    %0 = vector.load %arg2[%c0, %c0_0, %c0_1] : memref<1x4x512xf32, #tpu.memory_space<vmem>>, vector<1x4x512xf32>
    %1 = vector.shape_cast %0 : vector<1x4x512xf32> to vector<4x512xf32>
    %c0_2 = arith.constant 0 : index
    %c0_3 = arith.constant 0 : index
    %c0_4 = arith.constant 0 : index
    %2 = vector.load %arg3[%c0_2, %c0_3, %c0_4] : memref<1x1x512xi32, #tpu.memory_space<vmem>>, vector<1x1x512xi32>
    %3 = vector.shape_cast %2 : vector<1x1x512xi32> to vector<1x512xi32>
    %4 = tpu.iota {dimensions = array<i32: 0>} : vector<4x512xi32>
    %5 = vector.broadcast %3 : vector<1x512xi32> to vector<4x512xi32>
    %6 = arith.cmpi eq, %5, %4 : vector<4x512xi32>
    %7 = arith.extui %6 : vector<4x512xi1> to vector<4x512xi32>
    %8 = arith.sitofp %7 : vector<4x512xi32> to vector<4x512xf32>
    %9 = arith.truncf %8 : vector<4x512xf32> to vector<4x512xbf16>
    %c0_5 = arith.constant 0 : index
    %c0_6 = arith.constant 0 : index
    %10 = vector.load %arg5[%c0_5, %c0_6] : memref<4x512xbf16, #tpu.memory_space<vmem>>, vector<4x512xbf16>
    tpu.vector_store %arg5[%c0_5, %c0_6], %9 {strides = array<i32>} : memref<4x512xbf16, #tpu.memory_space<vmem>>, vector<4x512xbf16>,
    %11 = arith.subf %8, %1 : vector<4x512xf32>
    %12 = math.absf %11 : vector<4x512xf32>
    %cst = arith.constant 0.000000e+00 : f32
    %13 = vector.broadcast %cst : f32 to vector<4x512xf32>
    %14 = arith.subf %13, %12 : vector<4x512xf32>
    %c0_7 = arith.constant 0 : index
    %c0_8 = arith.constant 0 : index
    %15 = vector.load %arg4[%c0_7, %c0_8] : memref<4x512xf32, #tpu.memory_space<vmem>>, vector<4x512xf32>
    tpu.vector_store %arg4[%c0_7, %c0_8], %14 {strides = array<i32>} : memref<4x512xf32, #tpu.memory_space<vmem>>, vector<4x512xf32>,
    %cst_9 = arith.constant dense<0.000000e+00> : vector<4xf32>
    %16 = vector.multi_reduction <add>, %8, %cst_9 [1] : vector<4x512xf32> to vector<4xf32>
    %17 = vector.shape_cast %16 : vector<4xf32> to vector<4x1xf32>
    %c0_10 = arith.constant 0 : index
    %c0_11 = arith.constant 0 : index
    %c0_12 = arith.constant 0 : index
    %c0_13 = arith.constant 0 : index
    %18 = vector.load %arg6[%c0_10, %c0_11, %c0_12, %c0_13] : memref<1x1x4x1xf32, #tpu.memory_space<vmem>>, vector<1x1x4x1xf32>
    %19 = vector.shape_cast %18 : vector<1x1x4x1xf32> to vector<4x1xf32>
    %20 = vector.shape_cast %17 : vector<4x1xf32> to vector<1x1x4x1xf32>
    tpu.vector_store %arg6[%c0_10, %c0_11, %c0_12, %c0_13], %20 {strides = array<i32>} : memref<1x1x4x1xf32, #tpu.memory_space<vmem>>, vector<1x1x4x1xf32>,
    return
  }
  func.func @transform_0(%arg0: i32, %arg1: i32) -> (i32, i32, i32) {
    %c0_i32 = arith.constant 0 : i32
    %c0_i32_0 = arith.constant 0 : i32
    return %arg0, %c0_i32, %arg1 : i32, i32, i32
  }
  func.func @transform_1(%arg0: i32, %arg1: i32) -> (i32, i32, i32) {
    %c0_i32 = arith.constant 0 : i32
    %c0_i32_0 = arith.constant 0 : i32
    return %arg0, %c0_i32, %arg1 : i32, i32, i32
  }
  func.func @transform_2(%arg0: i32, %arg1: i32) -> (i32, i32) {
    %c1_i32 = arith.constant 1 : i32
    %0 = arith.muli %arg0, %c1_i32 : i32
    %1 = arith.addi %0, %arg1 : i32
    %c0_i32 = arith.constant 0 : i32
    %c0_i32_0 = arith.constant 0 : i32
    return %c0_i32, %1 : i32, i32
  }
  func.func @transform_3(%arg0: i32, %arg1: i32) -> (i32, i32) {
    %c1_i32 = arith.constant 1 : i32
    %0 = arith.muli %arg0, %c1_i32 : i32
    %1 = arith.addi %0, %arg1 : i32
    %c0_i32 = arith.constant 0 : i32
    %c0_i32_0 = arith.constant 0 : i32
    return %c0_i32, %1 : i32, i32
  }
  func.func @transform_4(%arg0: i32, %arg1: i32) -> (i32, i32, i32, i32) {
    %c0_i32 = arith.constant 0 : i32
    %c0_i32_0 = arith.constant 0 : i32
    %c0_i32_1 = arith.constant 0 : i32
    return %arg0, %arg1, %c0_i32, %c0_i32_0 : i32, i32, i32, i32
  }
}

</mosaic_0001>

<llo_original>
// kernel: tpu_custom_call.1
$region0: #{tpu_custom_call.1}
  #allocation0 [shape = 'u32[]', space=smem, size = 0x4, offset = 0x4, fixed_abs, tag = 'smem constant byte address 0x4 - core index']
  #allocation1 [shape = 'u32[144,128]{1,0:T(1,128)}', space=vmem, size = 0x12000, scoped, tag = 'internal scratch']
  %s0 = inlined_call_operand.hbm [shape: f32[2,4,512], index: 0, kind: input, shape index: {}]
  %s1 = inlined_call_operand.hbm [shape: s32[2,1,512], index: 1, kind: input, shape index: {}]
  %s2 = inlined_call_operand.hbm [shape: f32[4,1024], index: 2, kind: output, shape index: {0}]
  %s3 = inlined_call_operand.hbm [shape: bf16[4,1024], index: 3, kind: output, shape index: {1}]
  %s4 = inlined_call_operand.vmem [shape: f32[2,1,4,1], index: 4, kind: output, shape index: {2}]
  %5 = xla_tuple %s2, %s3, %s4
  %s6 = sld [smem:[#allocation0]]
  $region65: #{tpu_custom_call.1} parent=0
    _
  %s8 = ssub.s32 1, %s6
  %s9 = scalar_select 0, %s8, %s6
  $region1: #{tpu_custom_call.1} parent=0
    #allocation2 [shape = 'u8[16384]{0}', space=vmem, size = 0x4000, scoped, tag = 'input window, operand 0']
    #allocation3 [shape = 's32[2]{0}', space=sflag, size = 0x8, scoped, tag = 'scoped memory for tpu_custom_call.1']
    #allocation4 [shape = 's32[2]{0}', space=sflag, size = 0x8, scoped, tag = 'scoped memory for tpu_custom_call.1']
    #allocation5 [shape = 'u8[4096]{0}', space=vmem, size = 0x1000, scoped, tag = 'input window, operand 1']
    #allocation6 [shape = 's32[2]{0}', space=sflag, size = 0x8, scoped, tag = 'scoped memory for tpu_custom_call.1']
    #allocation7 [shape = 'u8[16384]{0}', space=vmem, size = 0x4000, scoped, tag = 'output window, operand 0']
    #allocation8 [shape = 'u8[8192]{0}', space=vmem, size = 0x2000, scoped, tag = 'output window, operand 1']
    #allocation9 [shape = 's32[2]{0}', space=sflag, size = 0x8, scoped, tag = 'scoped memory for tpu_custom_call.1']
    %10 = vsyncpa [#allocation3], 0
    %s11 = scalar_lea.sflag [#allocation3], 1
    %12 = vsyncpa %s11, 0
    %13 = vsyncpa [#allocation6], 0
    %s14 = scalar_lea.sflag [#allocation6], 1
    %15 = vsyncpa %s14, 0
    %16 = vsyncpa [#allocation4], 0
    %s17 = scalar_lea.sflag [#allocation4], 1
    %18 = vsyncpa %s17, 0
    %19 = vsyncpa [#allocation9], 0
    %s20 = scalar_lea.sflag [#allocation9], 1
    %21 = vsyncpa %s20, 0
    loop: start=0, step=1, limit=4
    $region2: #{tpu_custom_call.1} parent=1 // loop_pre_header
      _
    $region3: #{tpu_custom_call.1} parent=1 // loop_header
      %s23 = sphi 0, %s27
      %p24 = scmp.ge.s32.totalorder %s23, 4
      %s30 = sphi 0, %s42
      %s31 = sphi 0, %s38
      %s32 = sphi 0, %s30
      %s33 = sphi 0, %s31
      %s34 = sphi 0, %s32
      %s35 = sphi 0, %s33
      %s47 = sphi 0, %s49
      %s50 = sphi 0, %s47
      %s51 = sphi 0, %s50
      %s67 = sphi 0, %s51
      %s75 = sphi 0, %s77
      %s78 = sphi 0, %s75
      %s79 = sphi 0, %s78
      %s95 = sphi 0, %s79
      %s103 = sphi 0, %s105
      %s106 = sphi 0, %s103
      %s107 = sphi 0, %s106
      %s123 = sphi 0, %s107
      %s131 = sphi 0, %s133
      %s134 = sphi 0, %s131
      %s135 = sphi 0, %s134
      %s151 = sphi 0, %s135
      %s159 = sphi 0, %s161
      %s162 = sphi 0, %s159
      %s163 = sphi 0, %s162
      %s179 = sphi 0, %s163
    $region4: #{tpu_custom_call.1} parent=1 // loop_header_branch
      %26 = sbr.rel (%p24) target = $region8
    $region5: #{tpu_custom_call.1} parent=1 // loop_body
      %s28 = ssub.s32 %s23, 1
      %s29 = ssub.s32 %s23, 2
      %s36 = sadd.s32 1, %s31
      %p37 = scmp.ge.s32.totalorder %s36, 1
      %s38 = scalar_select %p37, 0, %s36
      %s39 = sadd.s32 1, %s30
      %s40 = scalar_select %p37, %s39, %s30
      %p41 = scmp.ge.s32.totalorder %s40, 2
      %s42 = scalar_select %p41, 0, %s40
      %s43 = ssub.s32 %s30, %s42
      %s44 = ssub.s32 %s31, %s38
      %s45 = sor.u32 %s43, %s44
      %p46 = scmp.eq.s32.totalorder %s45, 0
      %s48 = sadd.s32 %s47, 1
      %s49 = scalar_select %p46, %s47, %s48
      %p52 = pneg %p46
      %p53 = scmp.eq.s32.totalorder %s23, 1
      %p54 = por %p52, %p53
      %p55 = scmp.ne.s32.totalorder %s47, %s50
      %p56 = scmp.eq.s32.totalorder %s23, 0
      %p57 = por %p55, %p56
      %p58 = scmp.ne.s32.totalorder %s47, %s50
      %p59 = scmp.eq.s32.totalorder %s28, 1
      %p60 = por %p58, %p59
      %p61 = scmp.ne.s32.totalorder %s50, %s51
      %p62 = scmp.eq.s32.totalorder %s28, 0
      %p63 = por %p61, %p62
      %p64 = scmp.ne.s32.totalorder %s50, %s51
      %p65 = scmp.eq.s32.totalorder %s29, 1
      %p66 = por %p64, %p65
      %p68 = scmp.ne.s32.totalorder %s51, %s67
      %p69 = scmp.eq.s32.totalorder %s29, 0
      %p70 = por %p68, %p69
      %s71 = ssub.s32 %s30, %s42
      %s72 = ssub.s32 %s31, %s38
      %s73 = sor.u32 %s71, %s72
      %p74 = scmp.eq.s32.totalorder %s73, 0
      %s76 = sadd.s32 %s75, 1
      %s77 = scalar_select %p74, %s75, %s76
      %p80 = pneg %p74
      %p81 = scmp.eq.s32.totalorder %s23, 1
      %p82 = por %p80, %p81
      %p83 = scmp.ne.s32.totalorder %s75, %s78
      %p84 = scmp.eq.s32.totalorder %s23, 0
      %p85 = por %p83, %p84
      %p86 = scmp.ne.s32.totalorder %s75, %s78
      %p87 = scmp.eq.s32.totalorder %s28, 1
      %p88 = por %p86, %p87
      %p89 = scmp.ne.s32.totalorder %s78, %s79
      %p90 = scmp.eq.s32.totalorder %s28, 0
      %p91 = por %p89, %p90
      %p92 = scmp.ne.s32.totalorder %s78, %s79
      %p93 = scmp.eq.s32.totalorder %s29, 1
      %p94 = por %p92, %p93
      %p96 = scmp.ne.s32.totalorder %s79, %s95
      %p97 = scmp.eq.s32.totalorder %s29, 0
      %p98 = por %p96, %p97
      %s99 = sadd.s32 %s30, %s31
      %s100 = sadd.s32 %s42, %s38
      %s101 = ssub.s32 %s99, %s100
      %p102 = scmp.eq.s32.totalorder %s101, 0
      %s104 = sadd.s32 %s103, 1
      %s105 = scalar_select %p102, %s103, %s104
      %p108 = pneg %p102
      %p109 = scmp.eq.s32.totalorder %s23, 1
      %p110 = por %p108, %p109
      %p111 = scmp.ne.s32.totalorder %s103, %s106
      %p112 = scmp.eq.s32.totalorder %s23, 0
      %p113 = por %p111, %p112
      %p114 = scmp.ne.s32.totalorder %s103, %s106
      %p115 = scmp.eq.s32.totalorder %s28, 1
      %p116 = por %p114, %p115
      %p117 = scmp.ne.s32.totalorder %s106, %s107
      %p118 = scmp.eq.s32.totalorder %s28, 0
      %p119 = por %p117, %p118
      %p120 = scmp.ne.s32.totalorder %s106, %s107
      %p121 = scmp.eq.s32.totalorder %s29, 1
      %p122 = por %p120, %p121
      %p124 = scmp.ne.s32.totalorder %s107, %s123
      %p125 = scmp.eq.s32.totalorder %s29, 0
      %p126 = por %p124, %p125
      %s127 = sadd.s32 %s30, %s31
      %s128 = sadd.s32 %s42, %s38
      %s129 = ssub.s32 %s127, %s128
      %p130 = scmp.eq.s32.totalorder %s129, 0
      %s132 = sadd.s32 %s131, 1
      %s133 = scalar_select %p130, %s131, %s132
      %p136 = pneg %p130
      %p137 = scmp.eq.s32.totalorder %s23, 1
      %p138 = por %p136, %p137
      %p139 = scmp.ne.s32.totalorder %s131, %s134
      %p140 = scmp.eq.s32.totalorder %s23, 0
      %p141 = por %p139, %p140
      %p142 = scmp.ne.s32.totalorder %s131, %s134
      %p143 = scmp.eq.s32.totalorder %s28, 1
      %p144 = por %p142, %p143
      %p145 = scmp.ne.s32.totalorder %s134, %s135
      %p146 = scmp.eq.s32.totalorder %s28, 0
      %p147 = por %p145, %p146
      %p148 = scmp.ne.s32.totalorder %s134, %s135
      %p149 = scmp.eq.s32.totalorder %s29, 1
      %p150 = por %p148, %p149
      %p152 = scmp.ne.s32.totalorder %s135, %s151
      %p153 = scmp.eq.s32.totalorder %s29, 0
      %p154 = por %p152, %p153
      %s155 = ssub.s32 %s30, %s42
      %s156 = ssub.s32 %s31, %s38
      %s157 = sor.u32 %s155, %s156
      %p158 = scmp.eq.s32.totalorder %s157, 0
      %s160 = sadd.s32 %s159, 1
      %s161 = scalar_select %p158, %s159, %s160
      %p164 = pneg %p158
      %p165 = scmp.eq.s32.totalorder %s23, 1
      %p166 = por %p164, %p165
      %p167 = scmp.ne.s32.totalorder %s159, %s162
      %p168 = scmp.eq.s32.totalorder %s23, 0
      %p169 = por %p167, %p168
      %p170 = scmp.ne.s32.totalorder %s159, %s162
      %p171 = scmp.eq.s32.totalorder %s28, 1
      %p172 = por %p170, %p171
      %p173 = scmp.ne.s32.totalorder %s162, %s163
      %p174 = scmp.eq.s32.totalorder %s28, 0
      %p175 = por %p173, %p174
      %p176 = scmp.ne.s32.totalorder %s162, %s163
      %p177 = scmp.eq.s32.totalorder %s29, 1
      %p178 = por %p176, %p177
      %p180 = scmp.ne.s32.totalorder %s163, %s179
      %p181 = scmp.eq.s32.totalorder %s29, 0
      %p182 = por %p180, %p181
      %p183 = scmp.le.s32.totalorder 1, %s23
      %p184 = scmp.lt.s32.totalorder %s23, 3
      %p185 = pnand %p183, %p184
      %p186 = pneg %p185
      // Predicated region
      $region9: #{tpu_custom_call.1} parent=5 // pred_check
        _
      $region10: #{tpu_custom_call.1} parent=5 // pred_check_branch
        %188 = sbr.rel (%p185) target = $region12
      $region11: #{tpu_custom_call.1} parent=5 // pred_region
        %s189 = ssub.s32 %s23, 1
      $region12: #{tpu_custom_call.1} parent=5 // pred_fallthru
        _
      %p190 = scmp.lt.s32.totalorder %s23, 2
      // Predicated region
      $region13: #{tpu_custom_call.1} parent=5 // pred_check
        %p191 = pneg %p190
      $region14: #{tpu_custom_call.1} parent=5 // pred_check_branch
        %193 = sbr.rel (%p191) target = $region16
      $region15: #{tpu_custom_call.1} parent=5 // pred_region
        // Predicated region
        $region17: #{tpu_custom_call.1} parent=15 // pred_check
          %p194 = pneg %p57
        $region18: #{tpu_custom_call.1} parent=15 // pred_check_branch
          %196 = sbr.rel (%p194) target = $region20
        $region19: #{tpu_custom_call.1} parent=15 // pred_region
          %s197 = sand.u32 %s47, 1
          %s198 = scalar_lea.sflag [#allocation3], %s197
          %s199 = sand.u32 %s47, 1
          %s200 = smul.addr %s199, 16
          %s201 = scalar_lea.vmem [#allocation2], %s200
          %s202 = smul.u32 4, %s31
          %s204 = ssub.s32 256, 256
          %205 = vsyncadd %s198, %s204
          %s206 = smul.addr %s30, 4
          %s207 = sadd.s32 %s202, %s206
          %s208 = smul.addr %s207, 64
          %s209 = scalar_lea.hbm %s0, %s208
          %s211 = sshll.u32 %s201, 4
          %s212 = int_to_ptr.vmem [resolvable:$true] %s211
          %214 = dma.hbm_to_vmem [thread:$0]  %s209, 256, %s212, %s198
        $region20: #{tpu_custom_call.1} parent=15 // pred_fallthru
          _
        // Predicated region
        $region21: #{tpu_custom_call.1} parent=15 // pred_check
          %p215 = pneg %p85
        $region22: #{tpu_custom_call.1} parent=15 // pred_check_branch
          %217 = sbr.rel (%p215) target = $region24
        $region23: #{tpu_custom_call.1} parent=15 // pred_region
          %s218 = sand.u32 %s75, 1
          %s219 = scalar_lea.sflag [#allocation6], %s218
          %s220 = sand.u32 %s75, 1
          %s221 = smul.addr %s220, 4
          %s222 = scalar_lea.vmem [#allocation5], %s221
          %s223 = smul.u32 4, %s31
          %s225 = ssub.s32 64, 64
          %226 = vsyncadd %s219, %s225
          %s227 = smul.addr %s30, 4
          %s228 = sadd.s32 %s223, %s227
          %s229 = smul.addr %s228, 16
          %s230 = scalar_lea.hbm %s1, %s229
          %s232 = sshll.u32 %s222, 4
          %s233 = int_to_ptr.vmem [resolvable:$true] %s232
          %235 = dma.hbm_to_vmem [thread:$0]  %s230, 64, %s233, %s219
        $region24: #{tpu_custom_call.1} parent=15 // pred_fallthru
          _
      $region16: #{tpu_custom_call.1} parent=5 // pred_fallthru
        _
      %p236 = scmp.le.s32.totalorder 1, %s23
      %p237 = scmp.lt.s32.totalorder %s23, 3
      %p238 = pnand %p236, %p237
      %p239 = pneg %p238
      // Predicated region
      $region25: #{tpu_custom_call.1} parent=5 // pred_check
        _
      $region26: #{tpu_custom_call.1} parent=5 // pred_check_branch
        %241 = sbr.rel (%p238) target = $region28
      $region27: #{tpu_custom_call.1} parent=5 // pred_region
        %s242 = ssub.s32 %s23, 1
        %s243 = sand.u32 %s50, 1
        %s244 = scalar_lea.sflag [#allocation3], %s243
        %s245 = sand.u32 %s50, 1
        %s246 = smul.addr %s245, 16
        %s247 = scalar_lea.vmem [#allocation2], %s246
        // Predicated region
        $region29: #{tpu_custom_call.1} parent=27 // pred_check
          %p248 = pneg %p63
        $region30: #{tpu_custom_call.1} parent=27 // pred_check_branch
          %250 = sbr.rel (%p248) target = $region32
        $region31: #{tpu_custom_call.1} parent=27 // pred_region
          %251 = dma.done %s244, 256
        $region32: #{tpu_custom_call.1} parent=27 // pred_fallthru
          _
        %s252 = sand.u32 %s78, 1
        %s253 = scalar_lea.sflag [#allocation6], %s252
        %s254 = sand.u32 %s78, 1
        %s255 = smul.addr %s254, 4
        %s256 = scalar_lea.vmem [#allocation5], %s255
        // Predicated region
        $region33: #{tpu_custom_call.1} parent=27 // pred_check
          %p257 = pneg %p91
        $region34: #{tpu_custom_call.1} parent=27 // pred_check_branch
          %259 = sbr.rel (%p257) target = $region36
        $region35: #{tpu_custom_call.1} parent=27 // pred_region
          %260 = dma.done %s253, 64
        $region36: #{tpu_custom_call.1} parent=27 // pred_fallthru
          _
        %s261 = sand.u32 %s50, 1
        %s262 = scalar_lea.sflag [#allocation3], %s261
        %s263 = sand.u32 %s50, 1
        %s264 = smul.addr %s263, 16
        %s265 = scalar_lea.vmem [#allocation2], %s264
        %p266 = pneg %p63
        %p267 = pneg %p60
        %s268 = sand.u32 %s78, 1
        %s269 = scalar_lea.sflag [#allocation6], %s268
        %s270 = sand.u32 %s78, 1
        %s271 = smul.addr %s270, 4
        %s272 = scalar_lea.vmem [#allocation5], %s271
        %p273 = pneg %p91
        %p274 = pneg %p88
        %p275 = pneg %p119
        %p276 = pneg %p116
        %s277 = sand.u32 %s106, 1
        %s278 = scalar_lea.sflag [#allocation4], %s277
        %s279 = sand.u32 %s106, 1
        %s280 = smul.addr %s279, 16
        %s281 = scalar_lea.vmem [#allocation7], %s280
        %p282 = pneg %p147
        %p283 = pneg %p144
        %s284 = sand.u32 %s134, 1
        %s285 = scalar_lea.sflag [#allocation9], %s284
        %s286 = sand.u32 %s134, 1
        %s287 = smul.addr %s286, 8
        %s288 = scalar_lea.vmem [#allocation8], %s287
        %p289 = pneg %p175
        %p290 = pneg %p172
        %p291 = scmp.lt.s32.totalorder %s32, 1
        %s292 = scalar_select %p291, %s32, 1
        %p293 = scmp.lt.s32.totalorder %s33, 0
        %s294 = scalar_select %p293, %s33, 0
        %s295 = sadd.s32 %s294, %s292
        %s296 = smul.addr %s295, 4
        %s297 = scalar_lea.vmem %s4, %s296
        %s298 = smul.u32 4, %s33
        %s299 = smul.u32 4, %s33
        %s300 = sadd.s32 %s32, %s33
        %s301 = smul.u32 4, %s300
        %s302 = sadd.s32 %s32, %s33
        %s303 = smul.u32 4, %s302
        %p304 = scmp.lt.s32.totalorder %s32, 1
        %s305 = scalar_select %p304, %s32, 1
        %p306 = scmp.lt.s32.totalorder %s33, 0
        %s307 = scalar_select %p306, %s33, 0
        %s308 = sadd.s32 %s307, %s305
        %s309 = smul.addr %s308, 4
        %s310 = scalar_lea.vmem %s4, %s309
        %v311 = vld [vmem:[%s247] sm:$0xff]
        %v312 = vld [vmem:[%s247 + $0x8] sm:$0xff]
        %v313 = vld [vmem:[%s256] sm:$0xf]
        %v314 = vlaneseq
        %v315 = vshrl.u32 %v314, 7
        %v316 = vlaneseq
        %v317 = vshrl.u32 %v316, 7
        %v318 = vsub.s32 0, %v317
        %v319 = vrot.slane %v313, %v318
        %v320 = vlaneseq
        %v321 = vshrl.u32 %v320, 7
        %v322 = vsub.s32 1, %v321
        %v323 = vrot.slane %v313, %v322
        %v324 = vlaneseq
        %v325 = vshrl.u32 %v324, 7
        %v326 = vsub.s32 2, %v325
        %v327 = vrot.slane %v313, %v326
        %v328 = vlaneseq
        %v329 = vshrl.u32 %v328, 7
        %v330 = vsub.s32 3, %v329
        %v331 = vrot.slane %v313, %v330
        %vm332 = vcmp.eq.s32.totalorder %v319, %v315
        %vm333 = vcmp.eq.s32.totalorder %v323, %v315
        %vm334 = vcmp.eq.s32.totalorder %v327, %v315
        %vm335 = vcmp.eq.s32.totalorder %v331, %v315
        %v336 = vsel %vm332, 1, 0
        %v337 = vsel %vm333, 1, 0
        %v338 = vsel %vm334, 1, 0
        %v339 = vsel %vm335, 1, 0
        %v340 = vcvt.s32.f32 %v336
        %v341 = vcvt.s32.f32 %v337
        %v342 = vcvt.s32.f32 %v338
        %v343 = vcvt.s32.f32 %v339
        %v344 = vpack.c.bf16 %v340, %v340
        %v345 = vpack.c.bf16 %v341, %v341
        %v346 = vpack.c.bf16 %v342, %v342
        %v347 = vpack.c.bf16 %v343, %v343
        %v352 = vcombine.low %v344, %v345
        %v353 = vcombine.low %v346, %v347
        %v355 = vunpack.c.l.s4 1983009808
        %v356 = vunpack.c.0.s8 %v355
        %v357 = vlaneseq
        %v358 = vshrl.u32 %v357, 7
        %v359 = vsub.s32 %v356, %v358
        %v360 = vrot.slane %v352, %v359
        %v362 = vunpack.c.l.s4 1983009808
        %v363 = vunpack.c.0.s8 %v362
        %v364 = vlaneseq
        %v365 = vshrl.u32 %v364, 7
        %v366 = vsub.s32 %v363, %v365
        %v367 = vrot.slane %v353, %v366
        %v368 = vcombine.low %v360, %v367
        %370 = vst [vmem:[%s288] sm:$0xff] %v368
        %v373 = vcombine.high %v311, %v311
        %v374 = vcombine.high %v312, %v312
        %v377 = vsub.f32 %v340, %v311
        %v378 = vsub.f32 %v341, %v373
        %v379 = vsub.f32 %v342, %v312
        %v380 = vsub.f32 %v343, %v374
        %v381 = vand.u32 2147483647, %v377
        %v382 = vand.u32 2147483647, %v378
        %v383 = vand.u32 2147483647, %v379
        %v384 = vand.u32 2147483647, %v380
        %v385 = vsub.f32 0.0, %v381
        %v386 = vsub.f32 0.0, %v382
        %v387 = vsub.f32 0.0, %v383
        %v388 = vsub.f32 0.0, %v384
        %v393 = vcombine.low %v385, %v386
        %v394 = vcombine.low %v387, %v388
        %397 = vst [vmem:[%s281] sm:$0xff] %v393
        %398 = vst [vmem:[%s281 + $0x8] sm:$0xff] %v394
        %vm399 = vcmask 1043456
        %v400 = vsel %vm399, %v340, 0.0
        %v401 = vsel %vm399, %v341, 0.0
        %v402 = vadd.f32 %v400, %v401
        %v403 = vsel %vm399, %v342, 0.0
        %v404 = vadd.f32 %v402, %v403
        %v405 = vsel %vm399, %v343, 0.0
        %v406 = vadd.f32 %v404, %v405
        %407 = vadd.xlane.f32.xlu0 %v406
        %v408 = vpop.xlane.xlu0 %407
        %vm409 = vcmask 3072
        %410 = vst.msk [vmem:[%s310] sm:$0xf] %vm409, %v408
        %s411 = sand.u32 %s106, 1
        %s412 = scalar_lea.sflag [#allocation4], %s411
        %s413 = sand.u32 %s106, 1
        %s414 = smul.addr %s413, 16
        %s415 = scalar_lea.vmem [#allocation7], %s414
        %s416 = sand.u32 %s134, 1
        %s417 = scalar_lea.sflag [#allocation9], %s416
        %s418 = sand.u32 %s134, 1
        %s419 = smul.addr %s418, 8
        %s420 = scalar_lea.vmem [#allocation8], %s419
        %p421 = scmp.lt.s32.totalorder %s32, 1
        %s422 = scalar_select %p421, %s32, 1
        %p423 = scmp.lt.s32.totalorder %s33, 0
        %s424 = scalar_select %p423, %s33, 0
        %s425 = sadd.s32 %s424, %s422
        %s426 = smul.addr %s425, 4
        %s427 = scalar_lea.vmem %s4, %s426
        // Predicated region
        $region37: #{tpu_custom_call.1} parent=27 // pred_check
          %p428 = pneg %p116
        $region38: #{tpu_custom_call.1} parent=27 // pred_check_branch
          %430 = sbr.rel (%p428) target = $region40
        $region39: #{tpu_custom_call.1} parent=27 // pred_region
          %s431 = sadd.s32 %s32, %s33
          %s432 = smul.u32 4, %s431
          %s434 = ssub.s32 256, 256
          %435 = vsyncadd %s412, %s434
          %s436 = smul.addr %s432, 64
          %s437 = scalar_lea.hbm %s2, %s436
          %s439 = sshll.u32 %s415, 4
          %s440 = int_to_ptr.vmem [resolvable:$true] %s439
          %442 = dma.vmem_to_hbm [thread:$0]  %s440, 256, %s437, %s412
        $region40: #{tpu_custom_call.1} parent=27 // pred_fallthru
          _
        // Predicated region
        $region41: #{tpu_custom_call.1} parent=27 // pred_check
          %p443 = pneg %p144
        $region42: #{tpu_custom_call.1} parent=27 // pred_check_branch
          %445 = sbr.rel (%p443) target = $region44
        $region43: #{tpu_custom_call.1} parent=27 // pred_region
          %s446 = sadd.s32 %s32, %s33
          %s447 = smul.u32 4, %s446
          %s449 = ssub.s32 128, 128
          %450 = vsyncadd %s417, %s449
          %s451 = smul.addr %s447, 32
          %s452 = scalar_lea.hbm %s3, %s451
          %s454 = sshll.u32 %s420, 4
          %s455 = int_to_ptr.vmem [resolvable:$true] %s454
          %457 = dma.vmem_to_hbm [thread:$0]  %s455, 128, %s452, %s417
        $region44: #{tpu_custom_call.1} parent=27 // pred_fallthru
          _
        // Predicated region
        $region45: #{tpu_custom_call.1} parent=27 // pred_check
          %p458 = pneg %p172
        $region46: #{tpu_custom_call.1} parent=27 // pred_check_branch
          %460 = sbr.rel (%p458) target = $region48
        $region47: #{tpu_custom_call.1} parent=27 // pred_region
          _
        $region48: #{tpu_custom_call.1} parent=27 // pred_fallthru
          _
      $region28: #{tpu_custom_call.1} parent=5 // pred_fallthru
        _
      %p461 = scmp.le.s32.totalorder 2, %s23
      // Predicated region
      $region49: #{tpu_custom_call.1} parent=5 // pred_check
        %p462 = pneg %p461
      $region50: #{tpu_custom_call.1} parent=5 // pred_check_branch
        %464 = sbr.rel (%p462) target = $region52
      $region51: #{tpu_custom_call.1} parent=5 // pred_region
        %s465 = ssub.s32 %s23, 2
        // Predicated region
        $region53: #{tpu_custom_call.1} parent=51 // pred_check
          %p466 = pneg %p122
        $region54: #{tpu_custom_call.1} parent=51 // pred_check_branch
          %468 = sbr.rel (%p466) target = $region56
        $region55: #{tpu_custom_call.1} parent=51 // pred_region
          %s469 = sand.u32 %s107, 1
          %s470 = scalar_lea.sflag [#allocation4], %s469
          %s471 = sand.u32 %s107, 1
          %s472 = smul.addr %s471, 16
          %s473 = scalar_lea.vmem [#allocation7], %s472
          %474 = dma.done %s470, 256
        $region56: #{tpu_custom_call.1} parent=51 // pred_fallthru
          _
        // Predicated region
        $region57: #{tpu_custom_call.1} parent=51 // pred_check
          %p475 = pneg %p150
        $region58: #{tpu_custom_call.1} parent=51 // pred_check_branch
          %477 = sbr.rel (%p475) target = $region60
        $region59: #{tpu_custom_call.1} parent=51 // pred_region
          %s478 = sand.u32 %s135, 1
          %s479 = scalar_lea.sflag [#allocation9], %s478
          %s480 = sand.u32 %s135, 1
          %s481 = smul.addr %s480, 8
          %s482 = scalar_lea.vmem [#allocation8], %s481
          %483 = dma.done %s479, 128
        $region60: #{tpu_custom_call.1} parent=51 // pred_fallthru
          _
        // Predicated region
        $region61: #{tpu_custom_call.1} parent=51 // pred_check
          %p484 = pneg %p178
        $region62: #{tpu_custom_call.1} parent=51 // pred_check_branch
          %486 = sbr.rel (%p484) target = $region64
        $region63: #{tpu_custom_call.1} parent=51 // pred_region
          %p487 = scmp.lt.s32.totalorder %s34, 1
          %s488 = scalar_select %p487, %s34, 1
          %p489 = scmp.lt.s32.totalorder %s35, 0
          %s490 = scalar_select %p489, %s35, 0
          %s491 = sadd.s32 %s490, %s488
          %s492 = smul.addr %s491, 4
          %s493 = scalar_lea.vmem %s4, %s492
        $region64: #{tpu_custom_call.1} parent=51 // pred_fallthru
          _
      $region52: #{tpu_custom_call.1} parent=5 // pred_fallthru
        _
    $region6: #{tpu_custom_call.1} parent=1 // loop_footer
      %s27 = sadd.s32 1, %s23
    $region7: #{tpu_custom_call.1} parent=1 // loop_footer_branch
      %22 = sbr.rel target = $region3
    $region8: #{tpu_custom_call.1} parent=1 // loop_exit
      _
    %494 = vsyncpa [#allocation3], 1
    %s495 = scalar_lea.sflag [#allocation3], 1
    %496 = vsyncpa %s495, 1
    %497 = vsyncpa [#allocation6], 1
    %s498 = scalar_lea.sflag [#allocation6], 1
    %499 = vsyncpa %s498, 1
    %500 = vsyncpa [#allocation4], 1
    %s501 = scalar_lea.sflag [#allocation4], 1
    %502 = vsyncpa %s501, 1
    %503 = vsyncpa [#allocation9], 1
    %s504 = scalar_lea.sflag [#allocation9], 1
    %505 = vsyncpa %s504, 1

</llo_original>
